<compile_context>
chip_gen: v7x
topology: tpu7x:2x2x1
jax: 0.10.0
libtpu: 0.0.40
codegen_flags: <defaults>
</compile_context>

<pallas_src>
import functools
import math

import jax
import jax.numpy as jnp
from jax import lax
from jax.experimental import pallas as pl
from jax.experimental.pallas import tpu as pltpu

NEG_INF = -1e30          # plain Python float (safe to capture in kernels)


def _tpu_tuning(L_Q):
    """Per-generation VMEM limit and L_Q tile size."""
    try:
        info = pltpu.get_tpu_info()
        vmem_cap = int(getattr(info, "vmem_capacity_bytes", 64 * 1024 * 1024))
    except Exception:                              # be conservative if query fails
        vmem_cap = 64 * 1024 * 1024
    if vmem_cap >= 96 * 1024 * 1024:               # v5e / v6e: 128 MiB physical
        vmem_limit, tq_base = 100 * 1024 * 1024, 512
    else:                                          # v7x: 64 MiB per TensorCore
        vmem_limit, tq_base = 48 * 1024 * 1024, 256
    tq = L_Q if L_Q <= tq_base else tq_base
    return vmem_limit, tq


# ---------------------------------------------------------------------------
# Kernel 1: per-head, per-L_Q-tile sparsity measure M (S never leaves VMEM).
# Computed in transposed orientation (keys on sublanes, queries on lanes) so
# both reductions are cross-sublane and the store is a lane-dense row.
# ---------------------------------------------------------------------------
def _m_kernel(q_ref, k_ref, wt_ref, m_ref, *, inv_L_K):
    q = q_ref[0]                                    # (tq, D)   bf16
    k = k_ref[0]                                    # (L_K, D)  bf16
    # S^T tile, MXU bf16 operands with f32 accumulation; lives only in VMEM.
    st = lax.dot_general(k, q, (((1,), (1,)), ((), ())),
                         preferred_element_type=jnp.float32)    # (L_K, tq) f32
    wt = wt_ref[...]                                # (L_K, tq) bf16 sample counts
    s_max = jnp.max(jnp.where(wt > 0.0, st, NEG_INF), axis=0)   # (tq,)
    s_sum = jnp.sum(st * wt.astype(jnp.float32), axis=0)        # (tq,)
    m_ref[0, 0, :] = s_max - s_sum * inv_L_K        # lane-dense row store


def _m_pallas(q_bf, k_bf, wcnt_t, tq, vmem_limit):
    BH, L_Q, D = q_bf.shape
    _, L_K, _ = k_bf.shape
    n_q = pl.cdiv(L_Q, tq)
    kern = functools.partial(_m_kernel, inv_L_K=1.0 / L_K)
    return pl.pallas_call(
        kern,
        out_shape=jax.ShapeDtypeStruct((BH, 1, L_Q), jnp.float32),
        # L_Q-tile axis outermost so the shared W^T block is fetched only n_q
        # times (its block index is constant across the inner head loop).
        grid=(n_q, BH),
        in_specs=[
            pl.BlockSpec((1, tq, D), lambda j, h: (h, j, 0)),    # Q    bf16
            pl.BlockSpec((1, L_K, D), lambda j, h: (h, 0, 0)),   # K    bf16
            pl.BlockSpec((L_K, tq), lambda j, h: (0, j)),        # W^T  bf16
        ],
        out_specs=pl.BlockSpec((1, 1, tq), lambda j, h: (h, 0, j)),
        compiler_params=pltpu.CompilerParams(
            dimension_semantics=("parallel", "parallel"),
            vmem_limit_bytes=vmem_limit),
    )(q_bf, k_bf, wcnt_t)


# ---------------------------------------------------------------------------
# Kernel 2: copy cumsum(V) context, score the pre-gathered top-u query rows,
# ProbMask from iota, softmax, attn@V, dynamic-row-store scatter.
# Selected indices arrive flattened via scalar prefetch (SMEM) for the scatter
# and as a (u_pad, 1) int32 column in VMEM for the mask.
# ---------------------------------------------------------------------------
def _ctx_kernel(idx_ref, qs_ref, k_ref, v_ref, idxv_ref, ctx_ref,
                out_ref, upd_ref, *, scale, u_pad):
    h = pl.program_id(0)

    # initial context (mask_flag=True): cumsum(V), computed once in XLA.
    out_ref[...] = ctx_ref[...]

    # top scores: (u_pad, D) x (D, L_K), bf16 operands, f32 accumulation.
    s = lax.dot_general(qs_ref[0], k_ref[0], (((1,), (1,)), ((), ())),
                        preferred_element_type=jnp.float32) * scale   # (u_pad, L_K)

    # ProbMask built on the fly: key position kp masked iff kp > idx[i].
    l_k = s.shape[-1]
    key_pos = lax.broadcasted_iota(jnp.int32, (u_pad, l_k), 1)
    s = jnp.where(key_pos <= idxv_ref[0], s, NEG_INF)

    # softmax over keys (exact reciprocal: the denominator is only u_pad values).
    m = jnp.max(s, axis=-1, keepdims=True)
    e = jnp.exp(s - m)
    attn = e * pl.reciprocal(jnp.sum(e, axis=-1, keepdims=True), approx=False)

    # value path kept in f32 for accuracy of the returned context.
    # TODO(synk): cast attn/V to bf16 here once verified against the reference.
    upd_ref[...] = jnp.dot(attn, v_ref[0], preferred_element_type=jnp.float32)

    # scatter: ctx[idx[i], :] = upd[i, :]; padded rows repeat the last index
    # and rewrite the identical value, so duplicates are harmless.
    def scatter(i, carry):
        qi = idx_ref[h * u_pad + i]
        out_ref[0, pl.ds(qi, 1), :] = upd_ref[pl.ds(i, 1), :]
        return carry
    lax.fori_loop(0, u_pad, scatter, 0, unroll=True)


def _ctx_pallas(idx_flat, q_sel_bf, k_bf, v, idx_vec, ctx_init,
                scale, u_pad, vmem_limit):
    BH, L_Q, D = ctx_init.shape
    _, L_K, _ = k_bf.shape
    kern = functools.partial(_ctx_kernel, scale=scale, u_pad=u_pad)
    grid_spec = pltpu.PrefetchScalarGridSpec(
        num_scalar_prefetch=1,                       # flattened M_top -> SMEM
        grid=(BH,),
        in_specs=[
            pl.BlockSpec((1, u_pad, D), lambda h, idx: (h, 0, 0)),   # Q_sel bf16
            pl.BlockSpec((1, L_K, D), lambda h, idx: (h, 0, 0)),     # K     bf16
            pl.BlockSpec((1, L_K, D), lambda h, idx: (h, 0, 0)),     # V     f32
            pl.BlockSpec((1, u_pad, 1), lambda h, idx: (h, 0, 0)),   # idx column
            pl.BlockSpec((1, L_Q, D), lambda h, idx: (h, 0, 0)),     # cumsum(V)
        ],
        out_specs=pl.BlockSpec((1, L_Q, D), lambda h, idx: (h, 0, 0)),
        scratch_shapes=[pltpu.VMEM((u_pad, D), jnp.float32)],        # updated rows
    )
    return pl.pallas_call(
        kern,
        out_shape=jax.ShapeDtypeStruct((BH, L_Q, D), v.dtype),
        grid_spec=grid_spec,
        compiler_params=pltpu.CompilerParams(
            dimension_semantics=("parallel",),
            vmem_limit_bytes=vmem_limit),
    )(idx_flat, q_sel_bf, k_bf, v, idx_vec, ctx_init)


# ---------------------------------------------------------------------------
# ProbAttention forward (mask_flag=True, output_attention=False)
# ---------------------------------------------------------------------------
def prob_attention(queries, keys, values, attn_mask=None, *, sample_key,
                   factor=5, scale=None):
    del attn_mask  # ProbMask is built internally when mask_flag=True
    B, L_Q, H, D = queries.shape
    _, L_K, _, _ = keys.shape
    assert L_Q == L_K, "mask_flag=True requires L_Q == L_V"

    # TODO(synk): index the native (B, L, H, D) layout from the BlockSpecs to
    # drop these full-tensor HBM transposes.
    q = jnp.transpose(queries, (0, 2, 1, 3)).reshape(B * H, L_Q, D)
    k = jnp.transpose(keys, (0, 2, 1, 3)).reshape(B * H, L_K, D)
    v = jnp.transpose(values, (0, 2, 1, 3)).reshape(B * H, L_K, D)

    U_part = min(factor * int(math.ceil(math.log(L_K))), L_K)
    u = min(factor * int(math.ceil(math.log(L_Q))), L_Q)
    u_pad = max(8, ((u + 7) // 8) * 8)             # sublane-aligned row count

    q_bf = q.astype(jnp.bfloat16)
    k_bf = k.astype(jnp.bfloat16)

    # Random column sampling (shared across heads, as in the PyTorch module),
    # as a transposed per-(key,query) sample-count matrix; counts <= U_part are
    # exact in bf16.
    index_sample = jax.random.randint(sample_key, (L_Q, U_part), 0, L_K)
    wcnt_t = jnp.zeros((L_K, L_Q), jnp.float32).at[
        index_sample, jnp.arange(L_Q)[:, None]].add(1.0).astype(jnp.bfloat16)

    vmem_limit, tq = _tpu_tuning(L_Q)

    M = _m_pallas(q_bf, k_bf, wcnt_t, tq, vmem_limit).reshape(B * H, L_Q)
    _, M_top = lax.top_k(M, u)                                   # (BH, u)
    if u_pad > u:                                                # pad by repeating
        M_top = jnp.concatenate(
            [M_top, jnp.broadcast_to(M_top[:, -1:], (B * H, u_pad - u))], axis=1)
    M_top = M_top.astype(jnp.int32)                              # (BH, u_pad)

    scale_val = float(scale) if scale is not None else 1.0 / math.sqrt(D)

    # gather the selected query rows in XLA (tiny) as the bf16 MXU operand
    q_sel_bf = jnp.take_along_axis(q_bf, M_top[..., None], axis=1)  # (BH,u_pad,D)

    ctx_init = jnp.cumsum(v, axis=1)                             # mask_flag=True

    ctx = _ctx_pallas(M_top.reshape(-1), q_sel_bf, k_bf, v,
                      M_top[..., None], ctx_init, scale_val, u_pad, vmem_limit)

    ctx = jnp.transpose(ctx.reshape(B, H, L_Q, D), (0, 2, 1, 3))  # (B, L_Q, H, D)
    return ctx, None                                              # output_attention=False


# ---------------------------------------------------------------------------
# Pure-JAX reference (mirrors the PyTorch module; same bf16-operand scoring so
# the discrete top-k selection agrees with the kernel path)
# ---------------------------------------------------------------------------
def prob_attention_ref(queries, keys, values, *, sample_key, factor=5, scale=None):
    B, L_Q, H, D = queries.shape
    _, L_K, _, _ = keys.shape
    q = jnp.transpose(queries, (0, 2, 1, 3))
    k = jnp.transpose(keys, (0, 2, 1, 3))
    v = jnp.transpose(values, (0, 2, 1, 3))

    U_part = min(factor * int(math.ceil(math.log(L_K))), L_K)
    u = min(factor * int(math.ceil(math.log(L_Q))), L_Q)

    S = jnp.einsum("bhqd,bhkd->bhqk",
                   q.astype(jnp.bfloat16), k.astype(jnp.bfloat16),
                   preferred_element_type=jnp.float32)
    index_sample = jax.random.randint(sample_key, (L_Q, U_part), 0, L_K)
    wcnt = jnp.zeros((L_Q, L_K), jnp.float32).at[
        jnp.arange(L_Q)[:, None], index_sample].add(1.0)
    M = (jnp.max(jnp.where(wcnt[None, None] > 0.0, S, NEG_INF), axis=-1)
         - jnp.sum(S * wcnt[None, None], axis=-1) / L_K)
    _, M_top = lax.top_k(M, u)

    scale_val = float(scale) if scale is not None else 1.0 / math.sqrt(D)
    scores_top = jnp.take_along_axis(S, M_top[..., None], axis=2) * scale_val

    ctx = jnp.cumsum(v, axis=-2)
    key_pos = jnp.arange(L_K)[None, None, None, :]
    scores_top = jnp.where(key_pos > M_top[..., None], NEG_INF, scores_top)
    attn = jax.nn.softmax(scores_top, axis=-1)
    upd = jnp.einsum("bhuk,bhkd->bhud", attn, v,
                     preferred_element_type=jnp.float32,
                     precision=lax.Precision.HIGHEST)

    bidx = jnp.arange(B)[:, None, None]
    hidx = jnp.arange(H)[None, :, None]
    ctx = ctx.at[bidx, hidx, M_top].set(upd.astype(ctx.dtype))
    return jnp.transpose(ctx, (0, 2, 1, 3))


if __name__ == "__main__":
    B, L, H, D = 2, 128, 4, 32   # L_Q == L_K == 128 (required by mask_flag=True)
    key = jax.random.PRNGKey(0)
    kq, kk, kv, ks = jax.random.split(key, 4)
    queries = jax.random.normal(kq, (B, L, H, D), jnp.float32)
    keys = jax.random.normal(kk, (B, L, H, D), jnp.float32)
    values = jax.random.normal(kv, (B, L, H, D), jnp.float32)

    ctx, attn = prob_attention(queries, keys, values, None, sample_key=ks)
    ctx = jax.block_until_ready(ctx)

    assert ctx.shape == (B, L, H, D)
    assert attn is None

    ref = jax.block_until_ready(
        prob_attention_ref(queries, keys, values, sample_key=ks))
    if not bool(jnp.allclose(ctx, ref, atol=3e-3, rtol=3e-3)):
        err = float(jnp.max(jnp.abs(ctx - ref)))
        raise AssertionError(
            f"Pallas ProbAttention does not match JAX reference (max abs err {err})")

    print("KERNEL_OK")
</pallas_src>

<mosaic_0001>
module attributes {stable_mosaic.version = 11 : i64} {
  func.func @_m_kernel(%arg0: i32, %arg1: i32, %arg2: memref<1x128x32xbf16, #tpu.memory_space<vmem>>, %arg3: memref<1x128x32xbf16, #tpu.memory_space<vmem>>, %arg4: memref<128x128xbf16, #tpu.memory_space<vmem>>, %arg5: memref<1x1x128xf32, #tpu.memory_space<vmem>>) attributes {dimension_semantics = [#tpu.dimension_semantics<parallel>, #tpu.dimension_semantics<parallel>], iteration_bounds = array<i64: 1, 8>, scalar_prefetch = 0 : i64, scratch_operands = 0 : i64, tpu.core_type = #tpu.core_type<tc>, window_params = [{transform_indices = @transform_0, window_bounds = array<i64: 1, 128, 32>}, {transform_indices = @transform_1, window_bounds = array<i64: 1, 128, 32>}, {transform_indices = @transform_2, window_bounds = array<i64: 128, 128>}, {transform_indices = @transform_3, window_bounds = array<i64: 1, 1, 128>}]} {
    %c0 = arith.constant 0 : index
    %c0_0 = arith.constant 0 : index
    %c0_1 = arith.constant 0 : index
    %0 = vector.load %arg2[%c0, %c0_0, %c0_1] : memref<1x128x32xbf16, #tpu.memory_space<vmem>>, vector<1x128x32xbf16>
    %1 = vector.shape_cast %0 : vector<1x128x32xbf16> to vector<128x32xbf16>
    %c0_2 = arith.constant 0 : index
    %c0_3 = arith.constant 0 : index
    %c0_4 = arith.constant 0 : index
    %2 = vector.load %arg3[%c0_2, %c0_3, %c0_4] : memref<1x128x32xbf16, #tpu.memory_space<vmem>>, vector<1x128x32xbf16>
    %3 = vector.shape_cast %2 : vector<1x128x32xbf16> to vector<128x32xbf16>
    %cst = arith.constant dense<0.000000e+00> : vector<128x128xf32>
    %4 = tpu.matmul %3, %1, %cst {dimension_numbers = #tpu.dot_dimension_numbers<[1], [1], [0], [0], [0, 0, 1, 0], [], []>} : vector<128x32xbf16>, vector<128x32xbf16>, vector<128x128xf32> -> vector<128x128xf32>
    %c0_5 = arith.constant 0 : index
    %c0_6 = arith.constant 0 : index
    %5 = vector.load %arg4[%c0_5, %c0_6] : memref<128x128xbf16, #tpu.memory_space<vmem>>, vector<128x128xbf16>
    %cst_7 = arith.constant 0.000000e+00 : bf16
    %6 = vector.broadcast %cst_7 : bf16 to vector<128x128xbf16>
    %7 = arith.cmpf ogt, %5, %6 : vector<128x128xbf16>
    %cst_8 = arith.constant -1.000000e+30 : f32
    %8 = vector.broadcast %cst_8 : f32 to vector<128x128xf32>
    %9 = arith.select %7, %4, %8 : vector<128x128xi1>, vector<128x128xf32>
    %cst_9 = arith.constant dense<0xFF800000> : vector<128xf32>
    %10 = vector.multi_reduction <maximumf>, %9, %cst_9 [0] : vector<128x128xf32> to vector<128xf32>
    %11 = arith.extf %5 : vector<128x128xbf16> to vector<128x128xf32>
    %12 = arith.mulf %4, %11 : vector<128x128xf32>
    %cst_10 = arith.constant dense<0.000000e+00> : vector<128xf32>
    %13 = vector.multi_reduction <add>, %12, %cst_10 [0] : vector<128x128xf32> to vector<128xf32>
    %cst_11 = arith.constant 7.812500e-03 : f32
    %14 = vector.broadcast %cst_11 : f32 to vector<128xf32>
    %15 = arith.mulf %13, %14 : vector<128xf32>
    %16 = arith.subf %10, %15 : vector<128xf32>
    %c0_12 = arith.constant 0 : index
    %c0_13 = arith.constant 0 : index
    %c0_14 = arith.constant 0 : index
    %17 = vector.load %arg5[%c0_12, %c0_13, %c0_14] : memref<1x1x128xf32, #tpu.memory_space<vmem>>, vector<1x1x128xf32>
    %18 = vector.shape_cast %17 : vector<1x1x128xf32> to vector<128xf32>
    %19 = vector.shape_cast %16 : vector<128xf32> to vector<1x1x128xf32>
    tpu.vector_store %arg5[%c0_12, %c0_13, %c0_14], %19 {strides = array<i32>} : memref<1x1x128xf32, #tpu.memory_space<vmem>>, vector<1x1x128xf32>,
    return
  }
  func.func @transform_0(%arg0: i32, %arg1: i32) -> (i32, i32, i32) {
    %c0_i32 = arith.constant 0 : i32
    %c0_i32_0 = arith.constant 0 : i32
    return %arg1, %arg0, %c0_i32 : i32, i32, i32
  }
  func.func @transform_1(%arg0: i32, %arg1: i32) -> (i32, i32, i32) {
    %c0_i32 = arith.constant 0 : i32
    %c0_i32_0 = arith.constant 0 : i32
    %c0_i32_1 = arith.constant 0 : i32
    return %arg1, %c0_i32, %c0_i32_0 : i32, i32, i32
  }
  func.func @transform_2(%arg0: i32, %arg1: i32) -> (i32, i32) {
    %c0_i32 = arith.constant 0 : i32
    %c0_i32_0 = arith.constant 0 : i32
    return %c0_i32, %arg0 : i32, i32
  }
  func.func @transform_3(%arg0: i32, %arg1: i32) -> (i32, i32, i32) {
    %c0_i32 = arith.constant 0 : i32
    %c0_i32_0 = arith.constant 0 : i32
    return %arg1, %c0_i32, %arg0 : i32, i32, i32
  }
}

</mosaic_0001>

<llo_original>
// kernel: tpu_custom_call.1
$region0: #{tpu_custom_call.1}
  #allocation0 [shape = 'u32[]', space=smem, size = 0x4, offset = 0x4, fixed_abs, tag = 'smem constant byte address 0x4 - core index']
  #allocation1 [shape = 'u32[144,128]{1,0:T(1,128)}', space=vmem, size = 0x12000, scoped, tag = 'internal scratch']
  %s0 = inlined_call_operand.vmem [shape: bf16[8,128,32], index: 0, kind: input, shape index: {}]
  %s1 = inlined_call_operand.vmem [shape: bf16[8,128,32], index: 1, kind: input, shape index: {}]
  %s2 = inlined_call_operand.vmem [shape: bf16[128,128], index: 2, kind: input, shape index: {}]
  %s3 = inlined_call_operand.hbm [shape: f32[8,1,128], index: 3, kind: output, shape index: {}]
  %s4 = sld [smem:[#allocation0]]
  $region45: #{tpu_custom_call.1} parent=0
    _
  %s6 = ssub.s32 1, %s4
  %s7 = scalar_select 0, %s6, %s4
  $region1: #{tpu_custom_call.1} parent=0
    #allocation2 [shape = 'u8[1024]{0}', space=vmem, size = 0x400, scoped, tag = 'output window, operand 0']
    #allocation3 [shape = 's32[2]{0}', space=sflag, size = 0x8, scoped, tag = 'scoped memory for tpu_custom_call.1']
    %8 = vsyncpa [#allocation3], 0
    %s9 = scalar_lea.sflag [#allocation3], 1
    %10 = vsyncpa %s9, 0
    loop: start=0, step=1, limit=10
    $region2: #{tpu_custom_call.1} parent=1 // loop_pre_header
      _
    $region3: #{tpu_custom_call.1} parent=1 // loop_header
      %s12 = sphi 0, %s16
      %p13 = scmp.ge.s32.totalorder %s12, 10
      %s19 = sphi 0, %s31
      %s20 = sphi 0, %s27
      %s21 = sphi 0, %s19
      %s22 = sphi 0, %s20
      %s23 = sphi 0, %s21
      %s24 = sphi 0, %s22
      %s36 = sphi 0, %s38
      %s39 = sphi 0, %s36
      %s40 = sphi 0, %s39
      %s56 = sphi 0, %s40
      %s62 = sphi 0, %s64
      %s65 = sphi 0, %s62
      %s66 = sphi 0, %s65
      %s82 = sphi 0, %s66
      %s88 = sphi 0, %s90
      %s91 = sphi 0, %s88
      %s92 = sphi 0, %s91
      %s108 = sphi 0, %s92
      %s116 = sphi 0, %s118
      %s119 = sphi 0, %s116
      %s120 = sphi 0, %s119
      %s136 = sphi 0, %s120
    $region4: #{tpu_custom_call.1} parent=1 // loop_header_branch
      %15 = sbr.rel (%p13) target = $region8
    $region5: #{tpu_custom_call.1} parent=1 // loop_body
      %s17 = ssub.s32 %s12, 1
      %s18 = ssub.s32 %s12, 2
      %s25 = sadd.s32 1, %s20
      %p26 = scmp.ge.s32.totalorder %s25, 8
      %s27 = scalar_select %p26, 0, %s25
      %s28 = sadd.s32 1, %s19
      %s29 = scalar_select %p26, %s28, %s19
      %p30 = scmp.ge.s32.totalorder %s29, 1
      %s31 = scalar_select %p30, 0, %s29
      %s32 = ssub.s32 %s20, %s27
      %s33 = ssub.s32 %s19, %s31
      %s34 = sor.u32 %s32, %s33
      %p35 = scmp.eq.s32.totalorder %s34, 0
      %s37 = sadd.s32 %s36, 1
      %s38 = scalar_select %p35, %s36, %s37
      %p41 = pneg %p35
      %p42 = scmp.eq.s32.totalorder %s12, 7
      %p43 = por %p41, %p42
      %p44 = scmp.ne.s32.totalorder %s36, %s39
      %p45 = scmp.eq.s32.totalorder %s12, 0
      %p46 = por %p44, %p45
      %p47 = scmp.ne.s32.totalorder %s36, %s39
      %p48 = scmp.eq.s32.totalorder %s17, 7
      %p49 = por %p47, %p48
      %p50 = scmp.ne.s32.totalorder %s39, %s40
      %p51 = scmp.eq.s32.totalorder %s17, 0
      %p52 = por %p50, %p51
      %p53 = scmp.ne.s32.totalorder %s39, %s40
      %p54 = scmp.eq.s32.totalorder %s18, 7
      %p55 = por %p53, %p54
      %p57 = scmp.ne.s32.totalorder %s40, %s56
      %p58 = scmp.eq.s32.totalorder %s18, 0
      %p59 = por %p57, %p58
      %s60 = ssub.s32 %s20, %s27
      %p61 = scmp.eq.s32.totalorder %s60, 0
      %s63 = sadd.s32 %s62, 1
      %s64 = scalar_select %p61, %s62, %s63
      %p67 = pneg %p61
      %p68 = scmp.eq.s32.totalorder %s12, 7
      %p69 = por %p67, %p68
      %p70 = scmp.ne.s32.totalorder %s62, %s65
      %p71 = scmp.eq.s32.totalorder %s12, 0
      %p72 = por %p70, %p71
      %p73 = scmp.ne.s32.totalorder %s62, %s65
      %p74 = scmp.eq.s32.totalorder %s17, 7
      %p75 = por %p73, %p74
      %p76 = scmp.ne.s32.totalorder %s65, %s66
      %p77 = scmp.eq.s32.totalorder %s17, 0
      %p78 = por %p76, %p77
      %p79 = scmp.ne.s32.totalorder %s65, %s66
      %p80 = scmp.eq.s32.totalorder %s18, 7
      %p81 = por %p79, %p80
      %p83 = scmp.ne.s32.totalorder %s66, %s82
      %p84 = scmp.eq.s32.totalorder %s18, 0
      %p85 = por %p83, %p84
      %s86 = ssub.s32 %s19, %s31
      %p87 = scmp.eq.s32.totalorder %s86, 0
      %s89 = sadd.s32 %s88, 1
      %s90 = scalar_select %p87, %s88, %s89
      %p93 = pneg %p87
      %p94 = scmp.eq.s32.totalorder %s12, 7
      %p95 = por %p93, %p94
      %p96 = scmp.ne.s32.totalorder %s88, %s91
      %p97 = scmp.eq.s32.totalorder %s12, 0
      %p98 = por %p96, %p97
      %p99 = scmp.ne.s32.totalorder %s88, %s91
      %p100 = scmp.eq.s32.totalorder %s17, 7
      %p101 = por %p99, %p100
      %p102 = scmp.ne.s32.totalorder %s91, %s92
      %p103 = scmp.eq.s32.totalorder %s17, 0
      %p104 = por %p102, %p103
      %p105 = scmp.ne.s32.totalorder %s91, %s92
      %p106 = scmp.eq.s32.totalorder %s18, 7
      %p107 = por %p105, %p106
      %p109 = scmp.ne.s32.totalorder %s92, %s108
      %p110 = scmp.eq.s32.totalorder %s18, 0
      %p111 = por %p109, %p110
      %s112 = ssub.s32 %s20, %s27
      %s113 = ssub.s32 %s19, %s31
      %s114 = sor.u32 %s112, %s113
      %p115 = scmp.eq.s32.totalorder %s114, 0
      %s117 = sadd.s32 %s116, 1
      %s118 = scalar_select %p115, %s116, %s117
      %p121 = pneg %p115
      %p122 = scmp.eq.s32.totalorder %s12, 7
      %p123 = por %p121, %p122
      %p124 = scmp.ne.s32.totalorder %s116, %s119
      %p125 = scmp.eq.s32.totalorder %s12, 0
      %p126 = por %p124, %p125
      %p127 = scmp.ne.s32.totalorder %s116, %s119
      %p128 = scmp.eq.s32.totalorder %s17, 7
      %p129 = por %p127, %p128
      %p130 = scmp.ne.s32.totalorder %s119, %s120
      %p131 = scmp.eq.s32.totalorder %s17, 0
      %p132 = por %p130, %p131
      %p133 = scmp.ne.s32.totalorder %s119, %s120
      %p134 = scmp.eq.s32.totalorder %s18, 7
      %p135 = por %p133, %p134
      %p137 = scmp.ne.s32.totalorder %s120, %s136
      %p138 = scmp.eq.s32.totalorder %s18, 0
      %p139 = por %p137, %p138
      %p140 = scmp.le.s32.totalorder 1, %s12
      %p141 = scmp.lt.s32.totalorder %s12, 9
      %p142 = pnand %p140, %p141
      %p143 = pneg %p142
      // Predicated region
      $region9: #{tpu_custom_call.1} parent=5 // pred_check
        _
      $region10: #{tpu_custom_call.1} parent=5 // pred_check_branch
        %145 = sbr.rel (%p142) target = $region12
      $region11: #{tpu_custom_call.1} parent=5 // pred_region
        %s146 = ssub.s32 %s12, 1
        // Predicated region
        $region13: #{tpu_custom_call.1} parent=11 // pred_check
          %p147 = pneg %p104
        $region14: #{tpu_custom_call.1} parent=11 // pred_check_branch
          %149 = sbr.rel (%p147) target = $region16
        $region15: #{tpu_custom_call.1} parent=11 // pred_region
          %p150 = scmp.lt.s32.totalorder %s21, 0
          %s151 = scalar_select %p150, %s21, 0
          %s152 = smul.addr %s151, 4
          %s153 = scalar_lea.vmem %s2, %s152
        $region16: #{tpu_custom_call.1} parent=11 // pred_fallthru
          _
      $region12: #{tpu_custom_call.1} parent=5 // pred_fallthru
        _
      %p154 = scmp.lt.s32.totalorder %s12, 8
      // Predicated region
      $region17: #{tpu_custom_call.1} parent=5 // pred_check
        %p155 = pneg %p154
      $region18: #{tpu_custom_call.1} parent=5 // pred_check_branch
        %157 = sbr.rel (%p155) target = $region20
      $region19: #{tpu_custom_call.1} parent=5 // pred_region
        // Predicated region
        $region21: #{tpu_custom_call.1} parent=19 // pred_check
          %p158 = pneg %p46
        $region22: #{tpu_custom_call.1} parent=19 // pred_check_branch
          %160 = sbr.rel (%p158) target = $region24
        $region23: #{tpu_custom_call.1} parent=19 // pred_region
          %s161 = smul.u32 16, %s19
          %p162 = scmp.lt.s32.totalorder %s20, 7
          %s163 = scalar_select %p162, %s20, 7
          %p164 = scmp.lt.s32.totalorder %s161, 15
          %s165 = scalar_select %p164, %s161, 15
          %s166 = smul.addr %s163, 16
          %s167 = sadd.s32 %s165, %s166
          %s168 = smul.addr %s167, 4
          %s169 = scalar_lea.vmem %s0, %s168
          %s170 = smul.u32 16, %s19
        $region24: #{tpu_custom_call.1} parent=19 // pred_fallthru
          _
        // Predicated region
        $region25: #{tpu_custom_call.1} parent=19 // pred_check
          %p171 = pneg %p72
        $region26: #{tpu_custom_call.1} parent=19 // pred_check_branch
          %173 = sbr.rel (%p171) target = $region28
        $region27: #{tpu_custom_call.1} parent=19 // pred_region
          %p174 = scmp.lt.s32.totalorder %s20, 7
          %s175 = scalar_select %p174, %s20, 7
          %s176 = smul.addr %s175, 16
          %s177 = smul.addr %s176, 4
          %s178 = scalar_lea.vmem %s1, %s177
        $region28: #{tpu_custom_call.1} parent=19 // pred_fallthru
          _
      $region20: #{tpu_custom_call.1} parent=5 // pred_fallthru
        _
      %p179 = scmp.le.s32.totalorder 1, %s12
      %p180 = scmp.lt.s32.totalorder %s12, 9
      %p181 = pnand %p179, %p180
      %p182 = pneg %p181
      // Predicated region
      $region29: #{tpu_custom_call.1} parent=5 // pred_check
        _
      $region30: #{tpu_custom_call.1} parent=5 // pred_check_branch
        %184 = sbr.rel (%p181) target = $region32
      $region31: #{tpu_custom_call.1} parent=5 // pred_region
        %s185 = ssub.s32 %s12, 1
        %s186 = smul.u32 16, %s21
        %p187 = scmp.lt.s32.totalorder %s22, 7
        %s188 = scalar_select %p187, %s22, 7
        %p189 = scmp.lt.s32.totalorder %s186, 15
        %s190 = scalar_select %p189, %s186, 15
        %s191 = smul.addr %s188, 16
        %s192 = sadd.s32 %s190, %s191
        %s193 = smul.addr %s192, 4
        %s194 = scalar_lea.vmem %s0, %s193
        %p195 = pneg %p52
        %p196 = pneg %p49
        %p197 = scmp.lt.s32.totalorder %s22, 7
        %s198 = scalar_select %p197, %s22, 7
        %s199 = smul.addr %s198, 16
        %s200 = smul.addr %s199, 4
        %s201 = scalar_lea.vmem %s1, %s200
        %p202 = pneg %p78
        %p203 = pneg %p75
        %p204 = scmp.lt.s32.totalorder %s21, 0
        %s205 = scalar_select %p204, %s21, 0
        %s206 = smul.addr %s205, 4
        %s207 = scalar_lea.vmem %s2, %s206
        %p208 = pneg %p104
        %p209 = pneg %p101
        %p210 = pneg %p132
        %p211 = pneg %p129
        %s212 = sand.u32 %s119, 1
        %s213 = scalar_lea.sflag [#allocation3], %s212
        %s214 = sand.u32 %s119, 1
        %s215 = scalar_lea.vmem [#allocation2], %s214
        %s216 = smul.u32 16, %s21
        %p217 = scmp.lt.s32.totalorder %s22, 7
        %s218 = scalar_select %p217, %s22, 7
        %p219 = scmp.lt.s32.totalorder %s216, 15
        %s220 = scalar_select %p219, %s216, 15
        %s221 = smul.addr %s218, 16
        %s222 = sadd.s32 %s220, %s221
        %s223 = smul.addr %s222, 4
        %s224 = scalar_lea.vmem %s0, %s223
        %s225 = smul.u32 16, %s21
        %p226 = scmp.lt.s32.totalorder %s22, 7
        %s227 = scalar_select %p226, %s22, 7
        %s228 = smul.addr %s227, 16
        %s229 = smul.addr %s228, 4
        %s230 = scalar_lea.vmem %s1, %s229
        %p231 = scmp.lt.s32.totalorder %s21, 0
        %s232 = scalar_select %p231, %s21, 0
        %s233 = smul.addr %s232, 4
        %s234 = scalar_lea.vmem %s2, %s233
        %v238 = vld [vmem:[%s224] sm:$0xf]
        %v239 = vld [vmem:[%s224 + $0x4] sm:$0xf]
        %v240 = vld [vmem:[%s224 + $0x8] sm:$0xf]
        %v241 = vld [vmem:[%s224 + $0xc] sm:$0xf]
        %v242 = vld [vmem:[%s224 + $0x10] sm:$0xf]
        %v243 = vld [vmem:[%s224 + $0x14] sm:$0xf]
        %v244 = vld [vmem:[%s224 + $0x18] sm:$0xf]
        %v245 = vld [vmem:[%s224 + $0x1c] sm:$0xf]
        %v246 = vld [vmem:[%s224 + $0x20] sm:$0xf]
        %v247 = vld [vmem:[%s224 + $0x24] sm:$0xf]
        %v248 = vld [vmem:[%s224 + $0x28] sm:$0xf]
        %v249 = vld [vmem:[%s224 + $0x2c] sm:$0xf]
        %v250 = vld [vmem:[%s224 + $0x30] sm:$0xf]
        %v251 = vld [vmem:[%s224 + $0x34] sm:$0xf]
        %v252 = vld [vmem:[%s224 + $0x38] sm:$0xf]
        %v253 = vld [vmem:[%s224 + $0x3c] sm:$0xf]
        %v254 = vld [vmem:[%s230] sm:$0xf]
        %v255 = vld [vmem:[%s230 + $0x4] sm:$0xf]
        %v256 = vld [vmem:[%s230 + $0x8] sm:$0xf]
        %v257 = vld [vmem:[%s230 + $0xc] sm:$0xf]
        %v258 = vld [vmem:[%s230 + $0x10] sm:$0xf]
        %v259 = vld [vmem:[%s230 + $0x14] sm:$0xf]
        %v260 = vld [vmem:[%s230 + $0x18] sm:$0xf]
        %v261 = vld [vmem:[%s230 + $0x1c] sm:$0xf]
        %v262 = vld [vmem:[%s230 + $0x20] sm:$0xf]
        %v263 = vld [vmem:[%s230 + $0x24] sm:$0xf]
        %v264 = vld [vmem:[%s230 + $0x28] sm:$0xf]
        %v265 = vld [vmem:[%s230 + $0x2c] sm:$0xf]
        %v266 = vld [vmem:[%s230 + $0x30] sm:$0xf]
        %v267 = vld [vmem:[%s230 + $0x34] sm:$0xf]
        %v268 = vld [vmem:[%s230 + $0x38] sm:$0xf]
        %v269 = vld [vmem:[%s230 + $0x3c] sm:$0xf]
        %v286 = vunpack.c.l.b16 %v254
        %v287 = vunpack.c.l.b16 %v255
        %v288 = vunpack.c.l.b16 %v256
        %v289 = vunpack.c.l.b16 %v257
        %v290 = vunpack.c.l.b16 %v258
        %v291 = vunpack.c.l.b16 %v259
        %v292 = vunpack.c.l.b16 %v260
        %v293 = vunpack.c.l.b16 %v261
        %v294 = vunpack.c.l.b16 %v262
        %v295 = vunpack.c.l.b16 %v263
        %v296 = vunpack.c.l.b16 %v264
        %v297 = vunpack.c.l.b16 %v265
        %v298 = vunpack.c.l.b16 %v266
        %v299 = vunpack.c.l.b16 %v267
        %v300 = vunpack.c.l.b16 %v268
        %v301 = vunpack.c.l.b16 %v269
        %v302 = vpack.c.b16 %v287, %v286
        %v303 = vpack.c.b16 %v289, %v288
        %v304 = vpack.c.b16 %v291, %v290
        %v305 = vpack.c.b16 %v293, %v292
        %v306 = vpack.c.b16 %v295, %v294
        %v307 = vpack.c.b16 %v297, %v296
        %v308 = vpack.c.b16 %v299, %v298
        %v309 = vpack.c.b16 %v301, %v300
        %v326 = vunpack.c.l.b16 %v238
        %v327 = vunpack.c.l.b16 %v239
        %v328 = vunpack.c.l.b16 %v240
        %v329 = vunpack.c.l.b16 %v241
        %v330 = vunpack.c.l.b16 %v242
        %v331 = vunpack.c.l.b16 %v243
        %v332 = vunpack.c.l.b16 %v244
        %v333 = vunpack.c.l.b16 %v245
        %v334 = vunpack.c.l.b16 %v246
        %v335 = vunpack.c.l.b16 %v247
        %v336 = vunpack.c.l.b16 %v248
        %v337 = vunpack.c.l.b16 %v249
        %v338 = vunpack.c.l.b16 %v250
        %v339 = vunpack.c.l.b16 %v251
        %v340 = vunpack.c.l.b16 %v252
        %v341 = vunpack.c.l.b16 %v253
        %v342 = vpack.c.b16 %v327, %v326
        %v343 = vpack.c.b16 %v329, %v328
        %v344 = vpack.c.b16 %v331, %v330
        %v345 = vpack.c.b16 %v333, %v332
        %v346 = vpack.c.b16 %v335, %v334
        %v347 = vpack.c.b16 %v337, %v336
        %v348 = vpack.c.b16 %v339, %v338
        %v349 = vpack.c.b16 %v341, %v340
        %vm350 = vcmask 261120
        %v352 = vsel %vm350, %v302, 0
        %v355 = vsel %vm350, %v303, 0
        %v358 = vsel %vm350, %v304, 0
        %v361 = vsel %vm350, %v305, 0
        %v364 = vsel %vm350, %v306, 0
        %v367 = vsel %vm350, %v307, 0
        %v370 = vsel %vm350, %v308, 0
        %v373 = vsel %vm350, %v309, 0
        %v376 = vsel %vm350, %v342, 0
        %v379 = vsel %vm350, %v343, 0
        %v382 = vsel %vm350, %v344, 0
        %v385 = vsel %vm350, %v345, 0
        %v388 = vsel %vm350, %v346, 0
        %v391 = vsel %vm350, %v347, 0
        %v394 = vsel %vm350, %v348, 0
        %v397 = vsel %vm350, %v349, 0
        %399 = vmatprep.subr.bf16.mxu0 0
        %400 = vmatpush1.bf16.xpose.msra.mxu0 %v376
        %401 = vmatprep.subr.bf16.mxu0 0
        %402 = vmatpush1.bf16.xpose.msra.mxu0 %v379
        %403 = vmatprep.subr.bf16.mxu0 0
        %404 = vmatpush1.bf16.xpose.msra.mxu0 %v382
        %405 = vmatprep.subr.bf16.mxu0 0
        %406 = vmatpush1.bf16.xpose.msra.mxu0 %v385
        %407 = vmatprep.subr.bf16.mxu0 0
        %408 = vmatpush1.bf16.xpose.msra.mxu0 %v388
        %409 = vmatprep.subr.bf16.mxu0 0
        %410 = vmatpush1.bf16.xpose.msra.mxu0 %v391
        %411 = vmatprep.subr.bf16.mxu0 0
        %412 = vmatpush1.bf16.xpose.msra.mxu0 %v394
        %413 = vmatprep.subr.bf16.mxu0 0
        %414 = vmatpush1.bf16.xpose.msra.mxu0 %v397
        %415 = vmatprep.subr.bf16.mxu0 0
        %416 = vmatpush1.bf16.xpose.msra.mxu0 0
        %417 = vmatprep.subr.bf16.mxu0 0
        %418 = vmatpush1.bf16.xpose.msra.mxu0 0
        %419 = vmatprep.subr.bf16.mxu0 0
        %420 = vmatpush1.bf16.xpose.msra.mxu0 0
        %421 = vmatprep.subr.bf16.mxu0 0
        %422 = vmatpush1.bf16.xpose.msra.mxu0 0
        %423 = vmatprep.subr.bf16.mxu0 0
        %424 = vmatpush1.bf16.xpose.msra.mxu0 0
        %425 = vmatprep.subr.bf16.mxu0 0
        %426 = vmatpush1.bf16.xpose.msra.mxu0 0
        %427 = vmatprep.subr.bf16.mxu0 0
        %428 = vmatpush1.bf16.xpose.msra.mxu0 0
        %429 = vmatprep.subr.bf16.mxu0 0
        %430 = vmatpush1.bf16.xpose.msra.mxu0 0
        %431 = vmatprep.mubr.bf16.mxu0 0
        %432 = vmatmul.mubr.bf16.gmra.mrb[0].mxu0 %v352
        %v433 = vpop.f32.mrb[0].mxu0
        %v434 = vadd.f32 0.0, %v433
        %v435 = vpop.f32.mrb[0].mxu0
        %v436 = vpop.f32.mrb[0].mxu0
        %v437 = vadd.f32 0.0, %v436
        %v438 = vpop.f32.mrb[0].mxu0
        %439 = vmatprep.mubr.bf16.mxu0 0
        %440 = vmatmul.mubr.bf16.gmra.mrb[0].mxu0 %v355
        %v441 = vpop.f32.mrb[0].mxu0
        %v442 = vadd.f32 0.0, %v441
        %v443 = vpop.f32.mrb[0].mxu0
        %v444 = vpop.f32.mrb[0].mxu0
        %v445 = vadd.f32 0.0, %v444
        %v446 = vpop.f32.mrb[0].mxu0
        %447 = vmatprep.mubr.bf16.mxu0 0
        %448 = vmatmul.mubr.bf16.gmra.mrb[0].mxu0 %v358
        %v449 = vpop.f32.mrb[0].mxu0
        %v450 = vadd.f32 0.0, %v449
        %v451 = vpop.f32.mrb[0].mxu0
        %v452 = vpop.f32.mrb[0].mxu0
        %v453 = vadd.f32 0.0, %v452
        %v454 = vpop.f32.mrb[0].mxu0
        %455 = vmatprep.mubr.bf16.mxu0 0
        %456 = vmatmul.mubr.bf16.gmra.mrb[0].mxu0 %v361
        %v457 = vpop.f32.mrb[0].mxu0
        %v458 = vadd.f32 0.0, %v457
        %v459 = vpop.f32.mrb[0].mxu0
        %v460 = vpop.f32.mrb[0].mxu0
        %v461 = vadd.f32 0.0, %v460
        %v462 = vpop.f32.mrb[0].mxu0
        %463 = vmatprep.mubr.bf16.mxu0 0
        %464 = vmatmul.mubr.bf16.gmra.mrb[0].mxu0 %v364
        %v465 = vpop.f32.mrb[0].mxu0
        %v466 = vadd.f32 0.0, %v465
        %v467 = vpop.f32.mrb[0].mxu0
        %v468 = vpop.f32.mrb[0].mxu0
        %v469 = vadd.f32 0.0, %v468
        %v470 = vpop.f32.mrb[0].mxu0
        %471 = vmatprep.mubr.bf16.mxu0 0
        %472 = vmatmul.mubr.bf16.gmra.mrb[0].mxu0 %v367
        %v473 = vpop.f32.mrb[0].mxu0
        %v474 = vadd.f32 0.0, %v473
        %v475 = vpop.f32.mrb[0].mxu0
        %v476 = vpop.f32.mrb[0].mxu0
        %v477 = vadd.f32 0.0, %v476
        %v478 = vpop.f32.mrb[0].mxu0
        %479 = vmatprep.mubr.bf16.mxu0 0
        %480 = vmatmul.mubr.bf16.gmra.mrb[0].mxu0 %v370
        %v481 = vpop.f32.mrb[0].mxu0
        %v482 = vadd.f32 0.0, %v481
        %v483 = vpop.f32.mrb[0].mxu0
        %v484 = vpop.f32.mrb[0].mxu0
        %v485 = vadd.f32 0.0, %v484
        %v486 = vpop.f32.mrb[0].mxu0
        %487 = vmatprep.mubr.bf16.mxu0 0
        %488 = vmatmul.mubr.bf16.gmra.mrb[0].mxu0 %v373
        %v489 = vpop.f32.mrb[0].mxu0
        %v490 = vadd.f32 0.0, %v489
        %v491 = vpop.f32.mrb[0].mxu0
        %v492 = vpop.f32.mrb[0].mxu0
        %v493 = vadd.f32 0.0, %v492
        %v494 = vpop.f32.mrb[0].mxu0
        %495 = vdwg.mxu0
        %v496 = vld [vmem:[%s234] sm:$0xf]
        %v497 = vld [vmem:[%s234 + $0x4] sm:$0xf]
        %v498 = vld [vmem:[%s234 + $0x8] sm:$0xf]
        %v499 = vld [vmem:[%s234 + $0xc] sm:$0xf]
        %v500 = vld [vmem:[%s234 + $0x10] sm:$0xf]
        %v501 = vld [vmem:[%s234 + $0x14] sm:$0xf]
        %v502 = vld [vmem:[%s234 + $0x18] sm:$0xf]
        %v503 = vld [vmem:[%s234 + $0x1c] sm:$0xf]
        %v504 = vld [vmem:[%s234 + $0x20] sm:$0xf]
        %v505 = vld [vmem:[%s234 + $0x24] sm:$0xf]
        %v506 = vld [vmem:[%s234 + $0x28] sm:$0xf]
        %v507 = vld [vmem:[%s234 + $0x2c] sm:$0xf]
        %v508 = vld [vmem:[%s234 + $0x30] sm:$0xf]
        %v509 = vld [vmem:[%s234 + $0x34] sm:$0xf]
        %v510 = vld [vmem:[%s234 + $0x38] sm:$0xf]
        %v511 = vld [vmem:[%s234 + $0x3c] sm:$0xf]
        %vm512 = vcmp.gt.bf16.partialorder %v496, 0
        %vm513 = vcmp.gt.bf16.partialorder %v497, 0
        %vm514 = vcmp.gt.bf16.partialorder %v498, 0
        %vm515 = vcmp.gt.bf16.partialorder %v499, 0
        %vm516 = vcmp.gt.bf16.partialorder %v500, 0
        %vm517 = vcmp.gt.bf16.partialorder %v501, 0
        %vm518 = vcmp.gt.bf16.partialorder %v502, 0
        %vm519 = vcmp.gt.bf16.partialorder %v503, 0
        %vm520 = vcmp.gt.bf16.partialorder %v504, 0
        %vm521 = vcmp.gt.bf16.partialorder %v505, 0
        %vm522 = vcmp.gt.bf16.partialorder %v506, 0
        %vm523 = vcmp.gt.bf16.partialorder %v507, 0
        %vm524 = vcmp.gt.bf16.partialorder %v508, 0
        %vm525 = vcmp.gt.bf16.partialorder %v509, 0
        %vm526 = vcmp.gt.bf16.partialorder %v510, 0
        %vm527 = vcmp.gt.bf16.partialorder %v511, 0
        %v528 = vsel %vm512, 65537, 0
        %v529 = vsel %vm513, 65537, 0
        %v530 = vsel %vm514, 65537, 0
        %v531 = vsel %vm515, 65537, 0
        %v532 = vsel %vm516, 65537, 0
        %v533 = vsel %vm517, 65537, 0
        %v534 = vsel %vm518, 65537, 0
        %v535 = vsel %vm519, 65537, 0
        %v536 = vsel %vm520, 65537, 0
        %v537 = vsel %vm521, 65537, 0
        %v538 = vsel %vm522, 65537, 0
        %v539 = vsel %vm523, 65537, 0
        %v540 = vsel %vm524, 65537, 0
        %v541 = vsel %vm525, 65537, 0
        %v542 = vsel %vm526, 65537, 0
        %v543 = vsel %vm527, 65537, 0
        %v544 = vunpack.c.l.b16 %v528
        %v545 = vunpack.c.l.b16 %v529
        %v546 = vunpack.c.l.b16 %v530
        %v547 = vunpack.c.l.b16 %v531
        %v548 = vunpack.c.l.b16 %v532
        %v549 = vunpack.c.l.b16 %v533
        %v550 = vunpack.c.l.b16 %v534
        %v551 = vunpack.c.l.b16 %v535
        %v552 = vunpack.c.l.b16 %v536
        %v553 = vunpack.c.l.b16 %v537
        %v554 = vunpack.c.l.b16 %v538
        %v555 = vunpack.c.l.b16 %v539
        %v556 = vunpack.c.l.b16 %v540
        %v557 = vunpack.c.l.b16 %v541
        %v558 = vunpack.c.l.b16 %v542
        %v559 = vunpack.c.l.b16 %v543
        %vm560 = vcmp.ne.s32.totalorder %v544, 0
        %vm561 = vcmp.ne.s32.totalorder %v545, 0
        %vm562 = vcmp.ne.s32.totalorder %v546, 0
        %vm563 = vcmp.ne.s32.totalorder %v547, 0
        %vm564 = vcmp.ne.s32.totalorder %v548, 0
        %vm565 = vcmp.ne.s32.totalorder %v549, 0
        %vm566 = vcmp.ne.s32.totalorder %v550, 0
        %vm567 = vcmp.ne.s32.totalorder %v551, 0
        %vm568 = vcmp.ne.s32.totalorder %v552, 0
        %vm569 = vcmp.ne.s32.totalorder %v553, 0
        %vm570 = vcmp.ne.s32.totalorder %v554, 0
        %vm571 = vcmp.ne.s32.totalorder %v555, 0
        %vm572 = vcmp.ne.s32.totalorder %v556, 0
        %vm573 = vcmp.ne.s32.totalorder %v557, 0
        %vm574 = vcmp.ne.s32.totalorder %v558, 0
        %vm575 = vcmp.ne.s32.totalorder %v559, 0
        %v576 = vsel %vm560, %v434, -1e+30
        %v577 = vsel %vm561, %v437, -1e+30
        %v578 = vsel %vm562, %v442, -1e+30
        %v579 = vsel %vm563, %v445, -1e+30
        %v580 = vsel %vm564, %v450, -1e+30
        %v581 = vsel %vm565, %v453, -1e+30
        %v582 = vsel %vm566, %v458, -1e+30
        %v583 = vsel %vm567, %v461, -1e+30
        %v584 = vsel %vm568, %v466, -1e+30
        %v585 = vsel %vm569, %v469, -1e+30
        %v586 = vsel %vm570, %v474, -1e+30
        %v587 = vsel %vm571, %v477, -1e+30
        %v588 = vsel %vm572, %v482, -1e+30
        %v589 = vsel %vm573, %v485, -1e+30
        %v590 = vsel %vm574, %v490, -1e+30
        %v591 = vsel %vm575, %v493, -1e+30
        %v592 = vmax.f32 %v576, %v580
        %v593 = vmax.f32 %v577, %v581
        %v594 = vmax.f32 %v578, %v582
        %v595 = vmax.f32 %v579, %v583
        %v596 = vmax.f32 %v592, %v584
        %v597 = vmax.f32 %v593, %v585
        %v598 = vmax.f32 %v594, %v586
        %v599 = vmax.f32 %v595, %v587
        %v600 = vmax.f32 %v596, %v588
        %v601 = vmax.f32 %v597, %v589
        %v602 = vmax.f32 %v598, %v590
        %v603 = vmax.f32 %v599, %v591
        %v604 = vmax.f32 %v600, %v601
        %v605 = vmax.f32 %v602, %v603
        %v606 = vmax.f32 %v604, %v605
        %v607 = vrot.slane %v606, 4
        %v608 = vmax.f32 %v606, %v607
        %v609 = vrot.slane %v608, 2
        %v610 = vmax.f32 %v608, %v609
        %v611 = vrot.slane %v610, 1
        %v612 = vmax.f32 %v610, %v611
        %v613 = vunpack.c.l.bf16 %v496
        %v614 = vunpack.c.l.bf16 %v497
        %v615 = vunpack.c.l.bf16 %v498
        %v616 = vunpack.c.l.bf16 %v499
        %v617 = vunpack.c.l.bf16 %v500
        %v618 = vunpack.c.l.bf16 %v501
        %v619 = vunpack.c.l.bf16 %v502
        %v620 = vunpack.c.l.bf16 %v503
        %v621 = vunpack.c.l.bf16 %v504
        %v622 = vunpack.c.l.bf16 %v505
        %v623 = vunpack.c.l.bf16 %v506
        %v624 = vunpack.c.l.bf16 %v507
        %v625 = vunpack.c.l.bf16 %v508
        %v626 = vunpack.c.l.bf16 %v509
        %v627 = vunpack.c.l.bf16 %v510
        %v628 = vunpack.c.l.bf16 %v511
        %v629 = vmul.f32 %v434, %v613
        %v630 = vmul.f32 %v437, %v614
        %v631 = vmul.f32 %v442, %v615
        %v632 = vmul.f32 %v445, %v616
        %v633 = vmul.f32 %v450, %v617
        %v634 = vmul.f32 %v453, %v618
        %v635 = vmul.f32 %v458, %v619
        %v636 = vmul.f32 %v461, %v620
        %v637 = vmul.f32 %v466, %v621
        %v638 = vmul.f32 %v469, %v622
        %v639 = vmul.f32 %v474, %v623
        %v640 = vmul.f32 %v477, %v624
        %v641 = vmul.f32 %v482, %v625
        %v642 = vmul.f32 %v485, %v626
        %v643 = vmul.f32 %v490, %v627
        %v644 = vmul.f32 %v493, %v628
        %v645 = vadd.f32 %v629, %v630
        %v646 = vadd.f32 %v645, %v631
        %v647 = vadd.f32 %v646, %v632
        %v648 = vadd.f32 %v647, %v633
        %v649 = vadd.f32 %v648, %v634
        %v650 = vadd.f32 %v649, %v635
        %v651 = vadd.f32 %v650, %v636
        %v652 = vadd.f32 %v651, %v637
        %v653 = vadd.f32 %v652, %v638
        %v654 = vadd.f32 %v653, %v639
        %v655 = vadd.f32 %v654, %v640
        %v656 = vadd.f32 %v655, %v641
        %v657 = vadd.f32 %v656, %v642
        %v658 = vadd.f32 %v657, %v643
        %v659 = vadd.f32 %v658, %v644
        %v660 = vrot.slane %v659, 4
        %v661 = vadd.f32 %v659, %v660
        %v662 = vrot.slane %v661, 2
        %v663 = vadd.f32 %v661, %v662
        %v664 = vrot.slane %v663, 1
        %v665 = vadd.f32 %v663, %v664
        %v666 = vmul.f32 %v665, 0.0078125
        %v667 = vsub.f32 %v612, %v666
        %668 = vst [vmem:[%s215] sm:$0x1] %v667
        %s669 = sand.u32 %s119, 1
        %s670 = scalar_lea.sflag [#allocation3], %s669
        %s671 = sand.u32 %s119, 1
        %s672 = scalar_lea.vmem [#allocation2], %s671
        // Predicated region
        $region33: #{tpu_custom_call.1} parent=31 // pred_check
          %p673 = pneg %p129
        $region34: #{tpu_custom_call.1} parent=31 // pred_check_branch
          %675 = sbr.rel (%p673) target = $region36
        $region35: #{tpu_custom_call.1} parent=31 // pred_region
          %s677 = ssub.s32 16, 16
          %678 = vsyncadd %s670, %s677
          %s679 = sadd.s32 %s21, %s22
          %s680 = smul.addr %s679, 16
          %s681 = scalar_lea.hbm %s3, %s680
          %s683 = sshll.u32 %s672, 4
          %s684 = int_to_ptr.vmem [resolvable:$true] %s683
          %686 = dma.vmem_to_hbm [thread:$0]  %s684, 16, %s681, %s670
        $region36: #{tpu_custom_call.1} parent=31 // pred_fallthru
          _
      $region32: #{tpu_custom_call.1} parent=5 // pred_fallthru
        _
      %p687 = scmp.le.s32.totalorder 2, %s12
      // Predicated region
      $region37: #{tpu_custom_call.1} parent=5 // pred_check
        %p688 = pneg %p687
      $region38: #{tpu_custom_call.1} parent=5 // pred_check_branch
        %690 = sbr.rel (%p688) target = $region40
      $region39: #{tpu_custom_call.1} parent=5 // pred_region
        %s691 = ssub.s32 %s12, 2
        // Predicated region
        $region41: #{tpu_custom_call.1} parent=39 // pred_check
          %p692 = pneg %p135
        $region42: #{tpu_custom_call.1} parent=39 // pred_check_branch
          %694 = sbr.rel (%p692) target = $region44
        $region43: #{tpu_custom_call.1} parent=39 // pred_region
          %s695 = sand.u32 %s120, 1
          %s696 = scalar_lea.sflag [#allocation3], %s695
          %s697 = sand.u32 %s120, 1
          %s698 = scalar_lea.vmem [#allocation2], %s697
          %699 = dma.done %s696, 16
        $region44: #{tpu_custom_call.1} parent=39 // pred_fallthru
          _
      $region40: #{tpu_custom_call.1} parent=5 // pred_fallthru
        _
    $region6: #{tpu_custom_call.1} parent=1 // loop_footer
      %s16 = sadd.s32 1, %s12
    $region7: #{tpu_custom_call.1} parent=1 // loop_footer_branch
      %11 = sbr.rel target = $region3
    $region8: #{tpu_custom_call.1} parent=1 // loop_exit
      _
    %700 = vsyncpa [#allocation3], 1
    %s701 = scalar_lea.sflag [#allocation3], 1
    %702 = vsyncpa %s701, 1

</llo_original>
